<compile_context>
chip_gen: v5e
topology: v5e:2x2
jax: 0.10.0
libtpu: 0.0.40
codegen_flags: <defaults>
</compile_context>

<pallas_src>
import jax
import jax.numpy as jnp
from jax.experimental import pallas as pl
from jax.experimental.pallas import tpu as pltpu

_INV_SQRT2 = 0.7071067811865476  # 1/sqrt(2), hoisted Python constant


def _round_up(x, m):
    return (x + m - 1) // m * m


def _ffn_kernel(x_ref, w1_ref, b1_ref, w2_ref, b2_ref, o_ref, acc_ref):
    # x_ref:  (tile_m, E_pad)      w1_ref: (E_pad, tile_h)   b1_ref: (1, tile_h)
    # w2_ref: (tile_h, E_pad)      b2_ref: (1, E_pad)
    # o_ref:  (tile_m, E_pad)      acc_ref: (tile_m, E_pad) f32 scratch
    h_idx = pl.program_id(1)

    @pl.when(h_idx == 0)
    def _init():
        acc_ref[...] = jnp.zeros_like(acc_ref)

    # fc1 partial: native-dtype operands straight into the MXU, f32 accumulation.
    h = jnp.dot(x_ref[...], w1_ref[...], preferred_element_type=jnp.float32)
    h = h + b1_ref[...].astype(jnp.float32)

    # Exact GELU (erf-based), matches torch.nn.functional.gelu default.
    h = 0.5 * h * (1.0 + jax.lax.erf(h * _INV_SQRT2))

    # fc2 partial: accumulate over hidden-dim tiles in f32.
    acc_ref[...] += jnp.dot(h.astype(w2_ref.dtype), w2_ref[...],
                            preferred_element_type=jnp.float32)

    @pl.when(h_idx == pl.num_programs(1) - 1)
    def _finalize():
        o_ref[...] = (acc_ref[...]
                      + b2_ref[...].astype(jnp.float32)).astype(o_ref.dtype)


def position_wise_feed_forward(x, w1, b1, w2, b2, *, tile_m=256, tile_h=512):
    """x: (B, S, E); w1: (E, H); b1: (H,); w2: (H, E); b2: (E,).  Returns (B, S, E)."""
    B, S, E = x.shape
    H = w1.shape[1]
    M = B * S

    # Lane-dense / MXU-friendly padding and tile selection.
    E_pad = _round_up(E, 128)
    tile_m = min(tile_m, _round_up(M, 128))
    tile_h = min(tile_h, _round_up(H, 128))
    M_pad = _round_up(M, tile_m)
    H_pad = _round_up(H, tile_h)

    x2d = x.reshape(M, E)
    x_p = jnp.pad(x2d, ((0, M_pad - M), (0, E_pad - E)))
    w1_p = jnp.pad(w1, ((0, E_pad - E), (0, H_pad - H)))
    b1_p = jnp.pad(b1.reshape(1, H), ((0, 0), (0, H_pad - H)))
    w2_p = jnp.pad(w2, ((0, H_pad - H), (0, E_pad - E)))
    b2_p = jnp.pad(b2.reshape(1, E), ((0, 0), (0, E_pad - E)))

    grid = (M_pad // tile_m, H_pad // tile_h)

    # VMEM budget: double-buffered blocks + f32 accumulator, with headroom,
    # clamped to 64 MiB so it is valid on v7x as well as v5e/v6e.
    in_bytes = x.dtype.itemsize
    est = (2 * (tile_m * E_pad          # x tile
                + E_pad * tile_h        # W1 tile
                + tile_h                # b1 tile
                + tile_h * E_pad        # W2 tile
                + E_pad                 # b2
                + tile_m * E_pad)       # out tile
           * in_bytes
           + tile_m * E_pad * 4)        # f32 accumulator
    vmem_limit = min(max(int(est * 1.5) + (4 << 20), 32 << 20), 64 << 20)

    out_p = pl.pallas_call(
        _ffn_kernel,
        out_shape=jax.ShapeDtypeStruct((M_pad, E_pad), x.dtype),
        grid_spec=pltpu.PrefetchScalarGridSpec(
            num_scalar_prefetch=0,
            grid=grid,
            in_specs=[
                pl.BlockSpec((tile_m, E_pad), lambda i, h: (i, 0)),   # x row tile
                pl.BlockSpec((E_pad, tile_h), lambda i, h: (0, h)),   # W1 hidden tile
                pl.BlockSpec((1, tile_h),     lambda i, h: (0, h)),   # b1 hidden tile
                pl.BlockSpec((tile_h, E_pad), lambda i, h: (h, 0)),   # W2 hidden tile
                pl.BlockSpec((1, E_pad),      lambda i, h: (0, 0)),   # b2
            ],
            out_specs=pl.BlockSpec((tile_m, E_pad), lambda i, h: (i, 0)),
            scratch_shapes=[pltpu.VMEM((tile_m, E_pad), jnp.float32)],
        ),
        compiler_params=pltpu.CompilerParams(
            dimension_semantics=("parallel", "arbitrary"),
            vmem_limit_bytes=vmem_limit,
        ),
    )(x_p, w1_p, b1_p, w2_p, b2_p)

    return out_p[:M, :E].reshape(B, S, E)


def _reference_ffn(x, w1, b1, w2, b2):
    h = jnp.dot(x, w1) + b1
    h = 0.5 * h * (1.0 + jax.lax.erf(h * _INV_SQRT2))
    return jnp.dot(h, w2) + b2


if __name__ == "__main__":
    # Config: embed_dim=32, hidden_dim=64, bias=True, dropout=0.0 (inference).
    batch, seq, embed_dim, hidden_dim = 2, 8, 32, 64

    key = jax.random.PRNGKey(0)
    kx, k1, kb1, k2, kb2 = jax.random.split(key, 5)

    x = jax.random.normal(kx, (batch, seq, embed_dim), dtype=jnp.float32)

    # Deterministic parameter init (stored as (in, out) for the kernel).
    w1 = jax.random.normal(k1, (embed_dim, hidden_dim), dtype=jnp.float32) * 0.02
    b1 = jax.random.normal(kb1, (hidden_dim,), dtype=jnp.float32) * 0.02
    w2 = jax.random.normal(k2, (hidden_dim, embed_dim), dtype=jnp.float32) * 0.02
    b2 = jax.random.normal(kb2, (embed_dim,), dtype=jnp.float32) * 0.02

    out = position_wise_feed_forward(x, w1, b1, w2, b2)
    out = jax.block_until_ready(out)

    ref = _reference_ffn(x, w1, b1, w2, b2)
    assert out.shape == x.shape
    assert jnp.allclose(out, ref, atol=1e-5, rtol=1e-5), "mismatch vs reference"

    print("KERNEL_OK")
</pallas_src>

<mosaic_0001>
module attributes {stable_mosaic.version = 11 : i64} {
  func.func @_ffn_kernel(%arg0: i32, %arg1: i32, %arg2: memref<128x128xf32, #tpu.memory_space<vmem>>, %arg3: memref<128x128xf32, #tpu.memory_space<vmem>>, %arg4: memref<1x128xf32, #tpu.memory_space<vmem>>, %arg5: memref<128x128xf32, #tpu.memory_space<vmem>>, %arg6: memref<1x128xf32, #tpu.memory_space<vmem>>, %arg7: memref<128x128xf32, #tpu.memory_space<vmem>>, %arg8: memref<128x128xf32, #tpu.memory_space<vmem>>) attributes {dimension_semantics = [#tpu.dimension_semantics<parallel>, #tpu.dimension_semantics<arbitrary>], iteration_bounds = array<i64: 1, 1>, scalar_prefetch = 0 : i64, scratch_operands = 1 : i64, tpu.core_type = #tpu.core_type<tc>, window_params = [{transform_indices = @transform_0, window_bounds = array<i64: 128, 128>}, {transform_indices = @transform_1, window_bounds = array<i64: 128, 128>}, {transform_indices = @transform_2, window_bounds = array<i64: 1, 128>}, {transform_indices = @transform_3, window_bounds = array<i64: 128, 128>}, {pipeline_mode = #tpu.pipeline_mode<synchronous>, transform_indices = @transform_4, window_bounds = array<i64: 1, 128>}, {transform_indices = @transform_5, window_bounds = array<i64: 128, 128>}]} {
    %c0_i32 = arith.constant 0 : i32
    %0 = arith.cmpi eq, %arg1, %c0_i32 : i32
    %1 = arith.extui %0 : i1 to i32
    %c0_i32_0 = arith.constant 0 : i32
    %2 = arith.cmpi ne, %1, %c0_i32_0 : i32
    scf.if %2 {
      %cst_18 = arith.constant 0.000000e+00 : f32
      %25 = vector.broadcast %cst_18 : f32 to vector<128x128xf32>
      %c0_19 = arith.constant 0 : index
      %c0_20 = arith.constant 0 : index
      %26 = vector.load %arg8[%c0_19, %c0_20] : memref<128x128xf32, #tpu.memory_space<vmem>>, vector<128x128xf32>
      tpu.vector_store %arg8[%c0_19, %c0_20], %25 {strides = array<i32>} : memref<128x128xf32, #tpu.memory_space<vmem>>, vector<128x128xf32>,
    } else {
    }
    %c0 = arith.constant 0 : index
    %c0_1 = arith.constant 0 : index
    %3 = vector.load %arg2[%c0, %c0_1] : memref<128x128xf32, #tpu.memory_space<vmem>>, vector<128x128xf32>
    %c0_2 = arith.constant 0 : index
    %c0_3 = arith.constant 0 : index
    %4 = vector.load %arg3[%c0_2, %c0_3] : memref<128x128xf32, #tpu.memory_space<vmem>>, vector<128x128xf32>
    %cst = arith.constant dense<0.000000e+00> : vector<128x128xf32>
    %5 = tpu.matmul %3, %4, %cst {dimension_numbers = #tpu.dot_dimension_numbers<[1], [0], [0], [1], [0, 0, 1, 1], [], []>} : vector<128x128xf32>, vector<128x128xf32>, vector<128x128xf32> -> vector<128x128xf32>
    %c0_4 = arith.constant 0 : index
    %c0_5 = arith.constant 0 : index
    %6 = vector.load %arg4[%c0_4, %c0_5] : memref<1x128xf32, #tpu.memory_space<vmem>>, vector<1x128xf32>
    %7 = vector.broadcast %6 : vector<1x128xf32> to vector<128x128xf32>
    %8 = arith.addf %5, %7 : vector<128x128xf32>
    %cst_6 = arith.constant 5.000000e-01 : f32
    %9 = vector.broadcast %cst_6 : f32 to vector<128x128xf32>
    %10 = arith.mulf %9, %8 : vector<128x128xf32>
    %cst_7 = arith.constant 0.707106769 : f32
    %11 = vector.broadcast %cst_7 : f32 to vector<128x128xf32>
    %12 = arith.mulf %8, %11 : vector<128x128xf32>
    %13 = math.erf %12 : vector<128x128xf32>
    %cst_8 = arith.constant 1.000000e+00 : f32
    %14 = vector.broadcast %cst_8 : f32 to vector<128x128xf32>
    %15 = arith.addf %14, %13 : vector<128x128xf32>
    %16 = arith.mulf %10, %15 : vector<128x128xf32>
    %c0_9 = arith.constant 0 : index
    %c0_10 = arith.constant 0 : index
    %17 = vector.load %arg8[%c0_9, %c0_10] : memref<128x128xf32, #tpu.memory_space<vmem>>, vector<128x128xf32>
    %c0_11 = arith.constant 0 : index
    %c0_12 = arith.constant 0 : index
    %18 = vector.load %arg5[%c0_11, %c0_12] : memref<128x128xf32, #tpu.memory_space<vmem>>, vector<128x128xf32>
    %cst_13 = arith.constant dense<0.000000e+00> : vector<128x128xf32>
    %19 = tpu.matmul %16, %18, %cst_13 {dimension_numbers = #tpu.dot_dimension_numbers<[1], [0], [0], [1], [0, 0, 1, 1], [], []>} : vector<128x128xf32>, vector<128x128xf32>, vector<128x128xf32> -> vector<128x128xf32>
    %20 = arith.addf %17, %19 : vector<128x128xf32>
    %c0_14 = arith.constant 0 : index
    %c0_15 = arith.constant 0 : index
    %21 = vector.load %arg8[%c0_14, %c0_15] : memref<128x128xf32, #tpu.memory_space<vmem>>, vector<128x128xf32>
    tpu.vector_store %arg8[%c0_14, %c0_15], %20 {strides = array<i32>} : memref<128x128xf32, #tpu.memory_space<vmem>>, vector<128x128xf32>,
    %c0_i32_16 = arith.constant 0 : i32
    %22 = arith.cmpi eq, %arg1, %c0_i32_16 : i32
    %23 = arith.extui %22 : i1 to i32
    %c0_i32_17 = arith.constant 0 : i32
    %24 = arith.cmpi ne, %23, %c0_i32_17 : i32
    scf.if %24 {
      %c0_18 = arith.constant 0 : index
      %c0_19 = arith.constant 0 : index
      %25 = vector.load %arg8[%c0_18, %c0_19] : memref<128x128xf32, #tpu.memory_space<vmem>>, vector<128x128xf32>
      %c0_20 = arith.constant 0 : index
      %c0_21 = arith.constant 0 : index
      %26 = vector.load %arg6[%c0_20, %c0_21] : memref<1x128xf32, #tpu.memory_space<vmem>>, vector<1x128xf32>
      %27 = vector.broadcast %26 : vector<1x128xf32> to vector<128x128xf32>
      %28 = arith.addf %25, %27 : vector<128x128xf32>
      %c0_22 = arith.constant 0 : index
      %c0_23 = arith.constant 0 : index
      %29 = vector.load %arg7[%c0_22, %c0_23] : memref<128x128xf32, #tpu.memory_space<vmem>>, vector<128x128xf32>
      tpu.vector_store %arg7[%c0_22, %c0_23], %28 {strides = array<i32>} : memref<128x128xf32, #tpu.memory_space<vmem>>, vector<128x128xf32>,
    } else {
    }
    return
  }
  func.func @transform_0(%arg0: i32, %arg1: i32) -> (i32, i32) {
    %c0_i32 = arith.constant 0 : i32
    %c0_i32_0 = arith.constant 0 : i32
    return %arg0, %c0_i32 : i32, i32
  }
  func.func @transform_1(%arg0: i32, %arg1: i32) -> (i32, i32) {
    %c0_i32 = arith.constant 0 : i32
    %c0_i32_0 = arith.constant 0 : i32
    return %c0_i32, %arg1 : i32, i32
  }
  func.func @transform_2(%arg0: i32, %arg1: i32) -> (i32, i32) {
    %c0_i32 = arith.constant 0 : i32
    %c0_i32_0 = arith.constant 0 : i32
    return %c0_i32, %arg1 : i32, i32
  }
  func.func @transform_3(%arg0: i32, %arg1: i32) -> (i32, i32) {
    %c0_i32 = arith.constant 0 : i32
    %c0_i32_0 = arith.constant 0 : i32
    return %arg1, %c0_i32 : i32, i32
  }
  func.func @transform_4(%arg0: i32, %arg1: i32) -> (i32, i32) {
    %c0_i32 = arith.constant 0 : i32
    %c0_i32_0 = arith.constant 0 : i32
    %c0_i32_1 = arith.constant 0 : i32
    return %c0_i32, %c0_i32_0 : i32, i32
  }
  func.func @transform_5(%arg0: i32, %arg1: i32) -> (i32, i32) {
    %c0_i32 = arith.constant 0 : i32
    %c0_i32_0 = arith.constant 0 : i32
    return %arg0, %c0_i32 : i32, i32
  }
}

</mosaic_0001>

<llo_original>
// kernel: tpu_custom_call.1
$region0: #{tpu_custom_call.1}
  #allocation0 [shape = 'u32[]', space=smem, size = 0x4, offset = 0x4, fixed_abs, tag = 'smem constant byte address 0x4 - core index']
  #allocation1 [shape = 'u32[72,128]{1,0:T(1,128)}', space=vmem, size = 0x9000, scoped, tag = 'internal scratch']
  #allocation2 [shape = 'f32[128,128]{1,0:T(8,128)}', space=vmem, size = 0x10000, scoped, tag = 'scratch operand']
  %s0 = inlined_call_operand.hbm [shape: f32[128,128], index: 0, kind: input, shape index: {}]
  %s1 = inlined_call_operand.hbm [shape: f32[128,128], index: 1, kind: input, shape index: {}]
  %s2 = inlined_call_operand.vmem [shape: f32[1,128], index: 2, kind: input, shape index: {}]
  %s3 = inlined_call_operand.hbm [shape: f32[128,128], index: 3, kind: input, shape index: {}]
  %s4 = inlined_call_operand.vmem [shape: f32[1,128], index: 4, kind: input, shape index: {}]
  %s5 = inlined_call_operand.hbm [shape: f32[128,128], index: 5, kind: output, shape index: {}]
  %s6 = sld [smem:[#allocation0]]
  $region50: #{tpu_custom_call.1} parent=0
    _
  %s8 = ssub.s32 1, %s6
  %s9 = scalar_select 0, %s8, %s6
  $region1: #{tpu_custom_call.1} parent=0
    #allocation3 [shape = 'u8[65536]{0}', space=vmem, size = 0x10000, scoped, tag = 'input window, operand 0, single buffered']
    #allocation4 [shape = 's32[1]{0}', space=sflag, size = 0x4, scoped, tag = 'scoped memory for tpu_custom_call.1']
    #allocation5 [shape = 's32[1]{0}', space=sflag, size = 0x4, scoped, tag = 'scoped memory for tpu_custom_call.1']
    #allocation6 [shape = 'u8[65536]{0}', space=vmem, size = 0x10000, scoped, tag = 'input window, operand 1, single buffered']
    #allocation7 [shape = 's32[1]{0}', space=sflag, size = 0x4, scoped, tag = 'scoped memory for tpu_custom_call.1']
    #allocation8 [shape = 'u8[65536]{0}', space=vmem, size = 0x10000, scoped, tag = 'input window, operand 3, single buffered']
    #allocation9 [shape = 'u8[65536]{0}', space=vmem, size = 0x10000, scoped, tag = 'output window, operand 0, single buffered']
    %10 = vsyncpa [#allocation4], 0
    %11 = vsyncpa [#allocation7], 0
    %12 = vsyncpa [#allocation5], 0
    // Predicated region
    $region2: #{tpu_custom_call.1} parent=1 // pred_check
      _
    $region3: #{tpu_custom_call.1} parent=1 // pred_check_branch
      %14 = sbr.rel (0) target = $region5
    $region4: #{tpu_custom_call.1} parent=1 // pred_region
      %16 = vsyncadd [#allocation4], 0
      %s17 = sshll.u32 %s0, 4
      %s18 = int_to_ptr.hbm [resolvable:$true] %s17
      %s19 = sshll.u32 [#allocation3], 4
      %s20 = int_to_ptr.vmem [resolvable:$true] %s19
      %25 = dma.hbm_to_vmem [thread:$0]  %s18, 2048, %s20, [#allocation4], 128, 128, 8
    $region5: #{tpu_custom_call.1} parent=1 // pred_fallthru
      _
    // Predicated region
    $region6: #{tpu_custom_call.1} parent=1 // pred_check
      _
    $region7: #{tpu_custom_call.1} parent=1 // pred_check_branch
      %27 = sbr.rel (0) target = $region9
    $region8: #{tpu_custom_call.1} parent=1 // pred_region
      %29 = vsyncadd [#allocation7], 0
      %s30 = sshll.u32 %s1, 4
      %s31 = int_to_ptr.hbm [resolvable:$true] %s30
      %s32 = sshll.u32 [#allocation6], 4
      %s33 = int_to_ptr.vmem [resolvable:$true] %s32
      %38 = dma.hbm_to_vmem [thread:$0]  %s31, 2048, %s33, [#allocation7], 128, 128, 8
    $region9: #{tpu_custom_call.1} parent=1 // pred_fallthru
      _
    // Predicated region
    $region10: #{tpu_custom_call.1} parent=1 // pred_check
      _
    $region11: #{tpu_custom_call.1} parent=1 // pred_check_branch
      %40 = sbr.rel (0) target = $region13
    $region12: #{tpu_custom_call.1} parent=1 // pred_region
      _
    $region13: #{tpu_custom_call.1} parent=1 // pred_fallthru
      _
    // Predicated region
    $region14: #{tpu_custom_call.1} parent=1 // pred_check
      _
    $region15: #{tpu_custom_call.1} parent=1 // pred_check_branch
      %42 = sbr.rel (0) target = $region17
    $region16: #{tpu_custom_call.1} parent=1 // pred_region
      %44 = vsyncadd [#allocation7], 0
      %s45 = sshll.u32 %s3, 4
      %s46 = int_to_ptr.hbm [resolvable:$true] %s45
      %s47 = sshll.u32 [#allocation8], 4
      %s48 = int_to_ptr.vmem [resolvable:$true] %s47
      %53 = dma.hbm_to_vmem [thread:$0]  %s46, 2048, %s48, [#allocation7], 128, 128, 8
    $region17: #{tpu_custom_call.1} parent=1 // pred_fallthru
      _
    // Predicated region
    $region18: #{tpu_custom_call.1} parent=1 // pred_check
      _
    $region19: #{tpu_custom_call.1} parent=1 // pred_check_branch
      %55 = sbr.rel (0) target = $region21
    $region20: #{tpu_custom_call.1} parent=1 // pred_region
      _
    $region21: #{tpu_custom_call.1} parent=1 // pred_fallthru
      _
    // Predicated region
    $region22: #{tpu_custom_call.1} parent=1 // pred_check
      _
    $region23: #{tpu_custom_call.1} parent=1 // pred_check_branch
      %57 = sbr.rel (0) target = $region25
    $region24: #{tpu_custom_call.1} parent=1 // pred_region
      %59 = dma.done [#allocation4], 2048
    $region25: #{tpu_custom_call.1} parent=1 // pred_fallthru
      _
    // Predicated region
    $region26: #{tpu_custom_call.1} parent=1 // pred_check
      _
    $region27: #{tpu_custom_call.1} parent=1 // pred_check_branch
      %61 = sbr.rel (0) target = $region29
    $region28: #{tpu_custom_call.1} parent=1 // pred_region
      %63 = dma.done [#allocation7], 2048
    $region29: #{tpu_custom_call.1} parent=1 // pred_fallthru
      _
    // Predicated region
    $region30: #{tpu_custom_call.1} parent=1 // pred_check
      _
    $region31: #{tpu_custom_call.1} parent=1 // pred_check_branch
      %65 = sbr.rel (0) target = $region33
    $region32: #{tpu_custom_call.1} parent=1 // pred_region
      %67 = dma.done [#allocation7], 2048
    $region33: #{tpu_custom_call.1} parent=1 // pred_fallthru
      _
    %p68 = scmp.eq.s32.totalorder 0, 0
    // Predicated region
    $region34: #{tpu_custom_call.1} parent=1 // pred_check
      %p69 = pneg %p68
    $region35: #{tpu_custom_call.1} parent=1 // pred_check_branch
      %71 = sbr.rel (%p69) target = $region37
    $region36: #{tpu_custom_call.1} parent=1 // pred_region
      %72 = vst [vmem:[#allocation2] sm:$0xff] 0.0
      %73 = vst [vmem:[#allocation2 + $0x8] sm:$0xff] 0.0
      %74 = vst [vmem:[#allocation2 + $0x10] sm:$0xff] 0.0
      %75 = vst [vmem:[#allocation2 + $0x18] sm:$0xff] 0.0
      %76 = vst [vmem:[#allocation2 + $0x20] sm:$0xff] 0.0
      %77 = vst [vmem:[#allocation2 + $0x28] sm:$0xff] 0.0
      %78 = vst [vmem:[#allocation2 + $0x30] sm:$0xff] 0.0
      %79 = vst [vmem:[#allocation2 + $0x38] sm:$0xff] 0.0
      %80 = vst [vmem:[#allocation2 + $0x40] sm:$0xff] 0.0
      %81 = vst [vmem:[#allocation2 + $0x48] sm:$0xff] 0.0
      %82 = vst [vmem:[#allocation2 + $0x50] sm:$0xff] 0.0
      %83 = vst [vmem:[#allocation2 + $0x58] sm:$0xff] 0.0
      %84 = vst [vmem:[#allocation2 + $0x60] sm:$0xff] 0.0
      %85 = vst [vmem:[#allocation2 + $0x68] sm:$0xff] 0.0
      %86 = vst [vmem:[#allocation2 + $0x70] sm:$0xff] 0.0
      %87 = vst [vmem:[#allocation2 + $0x78] sm:$0xff] 0.0
    $region37: #{tpu_custom_call.1} parent=1 // pred_fallthru
      _
    %v88 = vld [vmem:[#allocation3] sm:$0xff]
    %v89 = vld [vmem:[#allocation3 + $0x8] sm:$0xff]
    %v90 = vld [vmem:[#allocation3 + $0x10] sm:$0xff]
    %v91 = vld [vmem:[#allocation3 + $0x18] sm:$0xff]
    %v92 = vld [vmem:[#allocation3 + $0x20] sm:$0xff]
    %v93 = vld [vmem:[#allocation3 + $0x28] sm:$0xff]
    %v94 = vld [vmem:[#allocation3 + $0x30] sm:$0xff]
    %v95 = vld [vmem:[#allocation3 + $0x38] sm:$0xff]
    %v96 = vld [vmem:[#allocation3 + $0x40] sm:$0xff]
    %v97 = vld [vmem:[#allocation3 + $0x48] sm:$0xff]
    %v98 = vld [vmem:[#allocation3 + $0x50] sm:$0xff]
    %v99 = vld [vmem:[#allocation3 + $0x58] sm:$0xff]
    %v100 = vld [vmem:[#allocation3 + $0x60] sm:$0xff]
    %v101 = vld [vmem:[#allocation3 + $0x68] sm:$0xff]
    %v102 = vld [vmem:[#allocation3 + $0x70] sm:$0xff]
    %v103 = vld [vmem:[#allocation3 + $0x78] sm:$0xff]
    %v104 = vld [vmem:[#allocation6] sm:$0xff]
    %v105 = vld [vmem:[#allocation6 + $0x8] sm:$0xff]
    %v106 = vld [vmem:[#allocation6 + $0x10] sm:$0xff]
    %v107 = vld [vmem:[#allocation6 + $0x18] sm:$0xff]
    %v108 = vld [vmem:[#allocation6 + $0x20] sm:$0xff]
    %v109 = vld [vmem:[#allocation6 + $0x28] sm:$0xff]
    %v110 = vld [vmem:[#allocation6 + $0x30] sm:$0xff]
    %v111 = vld [vmem:[#allocation6 + $0x38] sm:$0xff]
    %v112 = vld [vmem:[#allocation6 + $0x40] sm:$0xff]
    %v113 = vld [vmem:[#allocation6 + $0x48] sm:$0xff]
    %v114 = vld [vmem:[#allocation6 + $0x50] sm:$0xff]
    %v115 = vld [vmem:[#allocation6 + $0x58] sm:$0xff]
    %v116 = vld [vmem:[#allocation6 + $0x60] sm:$0xff]
    %v117 = vld [vmem:[#allocation6 + $0x68] sm:$0xff]
    %v118 = vld [vmem:[#allocation6 + $0x70] sm:$0xff]
    %v119 = vld [vmem:[#allocation6 + $0x78] sm:$0xff]
    %v120 = vld [vmem:[%s2] sm:$0x1]
    %v122 = vperm.slane %v120, 0
    %124 = vmatpush.msra.mxu0 %v119
    %125 = vmatpush.msra.mxu0 %v118
    %126 = vmatpush.msra.mxu0 %v117
    %127 = vmatpush.msra.mxu0 %v116
    %128 = vmatpush.msra.mxu0 %v115
    %129 = vmatpush.msra.mxu0 %v114
    %130 = vmatpush.msra.mxu0 %v113
    %131 = vmatpush.msra.mxu0 %v112
    %132 = vmatpush.msra.mxu0 %v111
    %133 = vmatpush.msra.mxu0 %v110
    %134 = vmatpush.msra.mxu0 %v109
    %135 = vmatpush.msra.mxu0 %v108
    %136 = vmatpush.msra.mxu0 %v107
    %137 = vmatpush.msra.mxu0 %v106
    %138 = vmatpush.msra.mxu0 %v105
    %139 = vmatpush.msra.mxu0 %v104
    %140 = vmatmul.f32.gmra.mxu0 %v88
    %v141 = vpop.f32.mrf.mxu0
    %v142 = vadd.f32 %v122, %v141
    %143 = vmatmul.f32.gmra.mxu0 %v89
    %v144 = vpop.f32.mrf.mxu0
    %v145 = vadd.f32 %v122, %v144
    %146 = vmatmul.f32.gmra.mxu0 %v90
    %v147 = vpop.f32.mrf.mxu0
    %v148 = vadd.f32 %v122, %v147
    %149 = vmatmul.f32.gmra.mxu0 %v91
    %v150 = vpop.f32.mrf.mxu0
    %v151 = vadd.f32 %v122, %v150
    %152 = vmatmul.f32.gmra.mxu0 %v92
    %v153 = vpop.f32.mrf.mxu0
    %v154 = vadd.f32 %v122, %v153
    %155 = vmatmul.f32.gmra.mxu0 %v93
    %v156 = vpop.f32.mrf.mxu0
    %v157 = vadd.f32 %v122, %v156
    %158 = vmatmul.f32.gmra.mxu0 %v94
    %v159 = vpop.f32.mrf.mxu0
    %v160 = vadd.f32 %v122, %v159
    %161 = vmatmul.f32.gmra.mxu0 %v95
    %v162 = vpop.f32.mrf.mxu0
    %v163 = vadd.f32 %v122, %v162
    %164 = vmatmul.f32.gmra.mxu0 %v96
    %v165 = vpop.f32.mrf.mxu0
    %v166 = vadd.f32 %v122, %v165
    %167 = vmatmul.f32.gmra.mxu0 %v97
    %v168 = vpop.f32.mrf.mxu0
    %v169 = vadd.f32 %v122, %v168
    %170 = vmatmul.f32.gmra.mxu0 %v98
    %v171 = vpop.f32.mrf.mxu0
    %v172 = vadd.f32 %v122, %v171
    %173 = vmatmul.f32.gmra.mxu0 %v99
    %v174 = vpop.f32.mrf.mxu0
    %v175 = vadd.f32 %v122, %v174
    %176 = vmatmul.f32.gmra.mxu0 %v100
    %v177 = vpop.f32.mrf.mxu0
    %v178 = vadd.f32 %v122, %v177
    %179 = vmatmul.f32.gmra.mxu0 %v101
    %v180 = vpop.f32.mrf.mxu0
    %v181 = vadd.f32 %v122, %v180
    %182 = vmatmul.f32.gmra.mxu0 %v102
    %v183 = vpop.f32.mrf.mxu0
    %v184 = vadd.f32 %v122, %v183
    %185 = vmatmul.f32.gmra.mxu0 %v103
    %v186 = vpop.f32.mrf.mxu0
    %v187 = vadd.f32 %v122, %v186
    %188 = vdwg.mxu0
    %v189 = vmul.f32 %v142, 0.5
    %v190 = vmul.f32 %v145, 0.5
    %v191 = vmul.f32 %v148, 0.5
    %v192 = vmul.f32 %v151, 0.5
    %v193 = vmul.f32 %v154, 0.5
    %v194 = vmul.f32 %v157, 0.5
    %v195 = vmul.f32 %v160, 0.5
    %v196 = vmul.f32 %v163, 0.5
    %v197 = vmul.f32 %v166, 0.5
    %v198 = vmul.f32 %v169, 0.5
    %v199 = vmul.f32 %v172, 0.5
    %v200 = vmul.f32 %v175, 0.5
    %v201 = vmul.f32 %v178, 0.5
    %v202 = vmul.f32 %v181, 0.5
    %v203 = vmul.f32 %v184, 0.5
    %v204 = vmul.f32 %v187, 0.5
    %v205 = vmul.f32 %v142, 0.70710677
    %v206 = vmul.f32 %v145, 0.70710677
    %v207 = vmul.f32 %v148, 0.70710677
    %v208 = vmul.f32 %v151, 0.70710677
    %v209 = vmul.f32 %v154, 0.70710677
    %v210 = vmul.f32 %v157, 0.70710677
    %v211 = vmul.f32 %v160, 0.70710677
    %v212 = vmul.f32 %v163, 0.70710677
    %v213 = vmul.f32 %v166, 0.70710677
    %v214 = vmul.f32 %v169, 0.70710677
    %v215 = vmul.f32 %v172, 0.70710677
    %v216 = vmul.f32 %v175, 0.70710677
    %v217 = vmul.f32 %v178, 0.70710677
    %v218 = vmul.f32 %v181, 0.70710677
    %v219 = vmul.f32 %v184, 0.70710677
    %v220 = vmul.f32 %v187, 0.70710677
    %v221 = vmul.f32 %v205, %v205
    %v222 = vmin.f32 16.0, %v221
    %v223 = vmul.f32 %v222, 2.1237322e-06
    %v224 = vadd.f32 %v223, 0.00028619796
    %v225 = vmul.f32 %v222, %v224
    %v226 = vadd.f32 %v225, 0.0036580483
    %v227 = vmul.f32 %v222, %v226
    %v228 = vadd.f32 %v227, 0.05243302
    %v229 = vmul.f32 %v222, %v228
    %v230 = vadd.f32 %v229, 0.18741608
    %v231 = vmul.f32 %v222, %v230
    %v232 = vadd.f32 %v231, 1.1283791
    %v233 = vmul.f32 %v205, %v232
    %v234 = vmul.f32 %v222, 3.8918573e-05
    %v235 = vadd.f32 %v234, 0.001143296
    %v236 = vmul.f32 %v222, %v235
    %v237 = vadd.f32 %v236, 0.014752088
    %v238 = vmul.f32 %v222, %v237
    %v239 = vadd.f32 %v238, 0.112945676
    %v240 = vmul.f32 %v222, %v239
    %v241 = vadd.f32 %v240, 0.4994258
    %v242 = vmul.f32 %v222, %v241
    %v243 = vadd.f32 %v242, 1.0
    %v244 = vrcp.pop %v243
    %v245 = vmul.f32 %v243, %v244
    %v246 = vsub.f32 1.0, %v245
    %v247 = vmul.f32 %v244, %v246
    %v248 = vadd.f32 %v244, %v247
    %vm249 = vweird.f32 %v243
    %vm250 = vweird.f32 %v244
    %vm251 = vmor %vm249, %vm250
    %v252 = vsel %vm251, %v244, %v248
    %v253 = vand.u32 2147483647, %v243
    %vm254 = vcmp.eq.f32.partialorder %v253, 8.507059e+37
    %v255 = vand.u32 %v243, 2147483648
    %v256 = vor.u32 1.1754944e-38, %v255
    %v257 = vsel %vm254, %v256, %v252
    %v258 = vmul.f32 %v233, %v257
    %v259 = vmin.f32 %v258, 1.0
    %v260 = vmax.f32 %v259, -1.0
    %v261 = vmul.f32 %v206, %v206
    %v262 = vmin.f32 16.0, %v261
    %v263 = vmul.f32 %v262, 2.1237322e-06
    %v264 = vadd.f32 %v263, 0.00028619796
    %v265 = vmul.f32 %v262, %v264
    %v266 = vadd.f32 %v265, 0.0036580483
    %v267 = vmul.f32 %v262, %v266
    %v268 = vadd.f32 %v267, 0.05243302
    %v269 = vmul.f32 %v262, %v268
    %v270 = vadd.f32 %v269, 0.18741608
    %v271 = vmul.f32 %v262, %v270
    %v272 = vadd.f32 %v271, 1.1283791
    %v273 = vmul.f32 %v206, %v272
    %v274 = vmul.f32 %v262, 3.8918573e-05
    %v275 = vadd.f32 %v274, 0.001143296
    %v276 = vmul.f32 %v262, %v275
    %v277 = vadd.f32 %v276, 0.014752088
    %v278 = vmul.f32 %v262, %v277
    %v279 = vadd.f32 %v278, 0.112945676
    %v280 = vmul.f32 %v262, %v279
    %v281 = vadd.f32 %v280, 0.4994258
    %v282 = vmul.f32 %v262, %v281
    %v283 = vadd.f32 %v282, 1.0
    %v284 = vrcp.pop %v283
    %v285 = vmul.f32 %v283, %v284
    %v286 = vsub.f32 1.0, %v285
    %v287 = vmul.f32 %v284, %v286
    %v288 = vadd.f32 %v284, %v287
    %vm289 = vweird.f32 %v283
    %vm290 = vweird.f32 %v284
    %vm291 = vmor %vm289, %vm290
    %v292 = vsel %vm291, %v284, %v288
    %v293 = vand.u32 2147483647, %v283
    %vm294 = vcmp.eq.f32.partialorder %v293, 8.507059e+37
    %v295 = vand.u32 %v283, 2147483648
    %v296 = vor.u32 1.1754944e-38, %v295
    %v297 = vsel %vm294, %v296, %v292
    %v298 = vmul.f32 %v273, %v297
    %v299 = vmin.f32 %v298, 1.0
    %v300 = vmax.f32 %v299, -1.0
    %v301 = vmul.f32 %v207, %v207
    %v302 = vmin.f32 16.0, %v301
    %v303 = vmul.f32 %v302, 2.1237322e-06
    %v304 = vadd.f32 %v303, 0.00028619796
    %v305 = vmul.f32 %v302, %v304
    %v306 = vadd.f32 %v305, 0.0036580483
    %v307 = vmul.f32 %v302, %v306
    %v308 = vadd.f32 %v307, 0.05243302
    %v309 = vmul.f32 %v302, %v308
    %v310 = vadd.f32 %v309, 0.18741608
    %v311 = vmul.f32 %v302, %v310
    %v312 = vadd.f32 %v311, 1.1283791
    %v313 = vmul.f32 %v207, %v312
    %v314 = vmul.f32 %v302, 3.8918573e-05
    %v315 = vadd.f32 %v314, 0.001143296
    %v316 = vmul.f32 %v302, %v315
    %v317 = vadd.f32 %v316, 0.014752088
    %v318 = vmul.f32 %v302, %v317
    %v319 = vadd.f32 %v318, 0.112945676
    %v320 = vmul.f32 %v302, %v319
    %v321 = vadd.f32 %v320, 0.4994258
    %v322 = vmul.f32 %v302, %v321
    %v323 = vadd.f32 %v322, 1.0
    %v324 = vrcp.pop %v323
    %v325 = vmul.f32 %v323, %v324
    %v326 = vsub.f32 1.0, %v325
    %v327 = vmul.f32 %v324, %v326
    %v328 = vadd.f32 %v324, %v327
    %vm329 = vweird.f32 %v323
    %vm330 = vweird.f32 %v324
    %vm331 = vmor %vm329, %vm330
    %v332 = vsel %vm331, %v324, %v328
    %v333 = vand.u32 2147483647, %v323
    %vm334 = vcmp.eq.f32.partialorder %v333, 8.507059e+37
    %v335 = vand.u32 %v323, 2147483648
    %v336 = vor.u32 1.1754944e-38, %v335
    %v337 = vsel %vm334, %v336, %v332
    %v338 = vmul.f32 %v313, %v337
    %v339 = vmin.f32 %v338, 1.0
    %v340 = vmax.f32 %v339, -1.0
    %v341 = vmul.f32 %v208, %v208
    %v342 = vmin.f32 16.0, %v341
    %v343 = vmul.f32 %v342, 2.1237322e-06
    %v344 = vadd.f32 %v343, 0.00028619796
    %v345 = vmul.f32 %v342, %v344
    %v346 = vadd.f32 %v345, 0.0036580483
    %v347 = vmul.f32 %v342, %v346
    %v348 = vadd.f32 %v347, 0.05243302
    %v349 = vmul.f32 %v342, %v348
    %v350 = vadd.f32 %v349, 0.18741608
    %v351 = vmul.f32 %v342, %v350
    %v352 = vadd.f32 %v351, 1.1283791
    %v353 = vmul.f32 %v208, %v352
    %v354 = vmul.f32 %v342, 3.8918573e-05
    %v355 = vadd.f32 %v354, 0.001143296
    %v356 = vmul.f32 %v342, %v355
    %v357 = vadd.f32 %v356, 0.014752088
    %v358 = vmul.f32 %v342, %v357
    %v359 = vadd.f32 %v358, 0.112945676
    %v360 = vmul.f32 %v342, %v359
    %v361 = vadd.f32 %v360, 0.4994258
    %v362 = vmul.f32 %v342, %v361
    %v363 = vadd.f32 %v362, 1.0
    %v364 = vrcp.pop %v363
    %v365 = vmul.f32 %v363, %v364
    %v366 = vsub.f32 1.0, %v365
    %v367 = vmul.f32 %v364, %v366
    %v368 = vadd.f32 %v364, %v367
    %vm369 = vweird.f32 %v363
    %vm370 = vweird.f32 %v364
    %vm371 = vmor %vm369, %vm370
    %v372 = vsel %vm371, %v364, %v368
    %v373 = vand.u32 2147483647, %v363
    %vm374 = vcmp.eq.f32.partialorder %v373, 8.507059e+37
    %v375 = vand.u32 %v363, 2147483648
    %v376 = vor.u32 1.1754944e-38, %v375
    %v377 = vsel %vm374, %v376, %v372
    %v378 = vmul.f32 %v353, %v377
    %v379 = vmin.f32 %v378, 1.0
    %v380 = vmax.f32 %v379, -1.0
    %v381 = vmul.f32 %v209, %v209
    %v382 = vmin.f32 16.0, %v381
    %v383 = vmul.f32 %v382, 2.1237322e-06
    %v384 = vadd.f32 %v383, 0.00028619796
    %v385 = vmul.f32 %v382, %v384
    %v386 = vadd.f32 %v385, 0.0036580483
    %v387 = vmul.f32 %v382, %v386
    %v388 = vadd.f32 %v387, 0.05243302
    %v389 = vmul.f32 %v382, %v388
    %v390 = vadd.f32 %v389, 0.18741608
    %v391 = vmul.f32 %v382, %v390
    %v392 = vadd.f32 %v391, 1.1283791
    %v393 = vmul.f32 %v209, %v392
    %v394 = vmul.f32 %v382, 3.8918573e-05
    %v395 = vadd.f32 %v394, 0.001143296
    %v396 = vmul.f32 %v382, %v395
    %v397 = vadd.f32 %v396, 0.014752088
    %v398 = vmul.f32 %v382, %v397
    %v399 = vadd.f32 %v398, 0.112945676
    %v400 = vmul.f32 %v382, %v399
    %v401 = vadd.f32 %v400, 0.4994258
    %v402 = vmul.f32 %v382, %v401
    %v403 = vadd.f32 %v402, 1.0
    %v404 = vrcp.pop %v403
    %v405 = vmul.f32 %v403, %v404
    %v406 = vsub.f32 1.0, %v405
    %v407 = vmul.f32 %v404, %v406
    %v408 = vadd.f32 %v404, %v407
    %vm409 = vweird.f32 %v403
    %vm410 = vweird.f32 %v404
    %vm411 = vmor %vm409, %vm410
    %v412 = vsel %vm411, %v404, %v408
    %v413 = vand.u32 2147483647, %v403
    %vm414 = vcmp.eq.f32.partialorder %v413, 8.507059e+37
    %v415 = vand.u32 %v403, 2147483648
    %v416 = vor.u32 1.1754944e-38, %v415
    %v417 = vsel %vm414, %v416, %v412
    %v418 = vmul.f32 %v393, %v417
    %v419 = vmin.f32 %v418, 1.0
    %v420 = vmax.f32 %v419, -1.0
    %v421 = vmul.f32 %v210, %v210
    %v422 = vmin.f32 16.0, %v421
    %v423 = vmul.f32 %v422, 2.1237322e-06
    %v424 = vadd.f32 %v423, 0.00028619796
    %v425 = vmul.f32 %v422, %v424
    %v426 = vadd.f32 %v425, 0.0036580483
    %v427 = vmul.f32 %v422, %v426
    %v428 = vadd.f32 %v427, 0.05243302
    %v429 = vmul.f32 %v422, %v428
    %v430 = vadd.f32 %v429, 0.18741608
    %v431 = vmul.f32 %v422, %v430
    %v432 = vadd.f32 %v431, 1.1283791
    %v433 = vmul.f32 %v210, %v432
    %v434 = vmul.f32 %v422, 3.8918573e-05
    %v435 = vadd.f32 %v434, 0.001143296
    %v436 = vmul.f32 %v422, %v435
    %v437 = vadd.f32 %v436, 0.014752088
    %v438 = vmul.f32 %v422, %v437
    %v439 = vadd.f32 %v438, 0.112945676
    %v440 = vmul.f32 %v422, %v439
    %v441 = vadd.f32 %v440, 0.4994258
    %v442 = vmul.f32 %v422, %v441
    %v443 = vadd.f32 %v442, 1.0
    %v444 = vrcp.pop %v443
    %v445 = vmul.f32 %v443, %v444
    %v446 = vsub.f32 1.0, %v445
    %v447 = vmul.f32 %v444, %v446
    %v448 = vadd.f32 %v444, %v447
    %vm449 = vweird.f32 %v443
    %vm450 = vweird.f32 %v444
    %vm451 = vmor %vm449, %vm450
    %v452 = vsel %vm451, %v444, %v448
    %v453 = vand.u32 2147483647, %v443
    %vm454 = vcmp.eq.f32.partialorder %v453, 8.507059e+37
    %v455 = vand.u32 %v443, 2147483648
    %v456 = vor.u32 1.1754944e-38, %v455
    %v457 = vsel %vm454, %v456, %v452
    %v458 = vmul.f32 %v433, %v457
    %v459 = vmin.f32 %v458, 1.0
    %v460 = vmax.f32 %v459, -1.0
    %v461 = vmul.f32 %v211, %v211
    %v462 = vmin.f32 16.0, %v461
    %v463 = vmul.f32 %v462, 2.1237322e-06
    %v464 = vadd.f32 %v463, 0.00028619796
    %v465 = vmul.f32 %v462, %v464
    %v466 = vadd.f32 %v465, 0.0036580483
    %v467 = vmul.f32 %v462, %v466
    %v468 = vadd.f32 %v467, 0.05243302
    %v469 = vmul.f32 %v462, %v468
    %v470 = vadd.f32 %v469, 0.18741608
    %v471 = vmul.f32 %v462, %v470
    %v472 = vadd.f32 %v471, 1.1283791
    %v473 = vmul.f32 %v211, %v472
    %v474 = vmul.f32 %v462, 3.8918573e-05
    %v475 = vadd.f32 %v474, 0.001143296
    %v476 = vmul.f32 %v462, %v475
    %v477 = vadd.f32 %v476, 0.014752088
    %v478 = vmul.f32 %v462, %v477
    %v479 = vadd.f32 %v478, 0.112945676
    %v480 = vmul.f32 %v462, %v479
    %v481 = vadd.f32 %v480, 0.4994258
    %v482 = vmul.f32 %v462, %v481
    %v483 = vadd.f32 %v482, 1.0
    %v484 = vrcp.pop %v483
    %v485 = vmul.f32 %v483, %v484
    %v486 = vsub.f32 1.0, %v485
    %v487 = vmul.f32 %v484, %v486
    %v488 = vadd.f32 %v484, %v487
    %vm489 = vweird.f32 %v483
    %vm490 = vweird.f32 %v484
    %vm491 = vmor %vm489, %vm490
    %v492 = vsel %vm491, %v484, %v488
    %v493 = vand.u32 2147483647, %v483
    %vm494 = vcmp.eq.f32.partialorder %v493, 8.507059e+37
    %v495 = vand.u32 %v483, 2147483648
    %v496 = vor.u32 1.1754944e-38, %v495
    %v497 = vsel %vm494, %v496, %v492
    %v498 = vmul.f32 %v473, %v497
    %v499 = vmin.f32 %v498, 1.0
    %v500 = vmax.f32 %v499, -1.0
    %v501 = vmul.f32 %v212, %v212
    %v502 = vmin.f32 16.0, %v501
    %v503 = vmul.f32 %v502, 2.1237322e-06
    %v504 = vadd.f32 %v503, 0.00028619796
    %v505 = vmul.f32 %v502, %v504
    %v506 = vadd.f32 %v505, 0.0036580483
    %v507 = vmul.f32 %v502, %v506
    %v508 = vadd.f32 %v507, 0.05243302
    %v509 = vmul.f32 %v502, %v508
    %v510 = vadd.f32 %v509, 0.18741608
    %v511 = vmul.f32 %v502, %v510
    %v512 = vadd.f32 %v511, 1.1283791
    %v513 = vmul.f32 %v212, %v512
    %v514 = vmul.f32 %v502, 3.8918573e-05
    %v515 = vadd.f32 %v514, 0.001143296
    %v516 = vmul.f32 %v502, %v515
    %v517 = vadd.f32 %v516, 0.014752088
    %v518 = vmul.f32 %v502, %v517
    %v519 = vadd.f32 %v518, 0.112945676
    %v520 = vmul.f32 %v502, %v519
    %v521 = vadd.f32 %v520, 0.4994258
    %v522 = vmul.f32 %v502, %v521
    %v523 = vadd.f32 %v522, 1.0
    %v524 = vrcp.pop %v523
    %v525 = vmul.f32 %v523, %v524
    %v526 = vsub.f32 1.0, %v525
    %v527 = vmul.f32 %v524, %v526
    %v528 = vadd.f32 %v524, %v527
    %vm529 = vweird.f32 %v523
    %vm530 = vweird.f32 %v524
    %vm531 = vmor %vm529, %vm530
    %v532 = vsel %vm531, %v524, %v528
    %v533 = vand.u32 2147483647, %v523
    %vm534 = vcmp.eq.f32.partialorder %v533, 8.507059e+37
    %v535 = vand.u32 %v523, 2147483648
    %v536 = vor.u32 1.1754944e-38, %v535
    %v537 = vsel %vm534, %v536, %v532
    %v538 = vmul.f32 %v513, %v537
    %v539 = vmin.f32 %v538, 1.0
    %v540 = vmax.f32 %v539, -1.0
    %v541 = vmul.f32 %v213, %v213
    %v542 = vmin.f32 16.0, %v541
    %v543 = vmul.f32 %v542, 2.1237322e-06
    %v544 = vadd.f32 %v543, 0.00028619796
    %v545 = vmul.f32 %v542, %v544
    %v546 = vadd.f32 %v545, 0.0036580483
    %v547 = vmul.f32 %v542, %v546
    %v548 = vadd.f32 %v547, 0.05243302
    %v549 = vmul.f32 %v542, %v548
    %v550 = vadd.f32 %v549, 0.18741608
    %v551 = vmul.f32 %v542, %v550
    %v552 = vadd.f32 %v551, 1.1283791
    %v553 = vmul.f32 %v213, %v552
    %v554 = vmul.f32 %v542, 3.8918573e-05
    %v555 = vadd.f32 %v554, 0.001143296
    %v556 = vmul.f32 %v542, %v555
    %v557 = vadd.f32 %v556, 0.014752088
    %v558 = vmul.f32 %v542, %v557
    %v559 = vadd.f32 %v558, 0.112945676
    %v560 = vmul.f32 %v542, %v559
    %v561 = vadd.f32 %v560, 0.4994258
    %v562 = vmul.f32 %v542, %v561
    %v563 = vadd.f32 %v562, 1.0
    %v564 = vrcp.pop %v563
    %v565 = vmul.f32 %v563, %v564
    %v566 = vsub.f32 1.0, %v565
    %v567 = vmul.f32 %v564, %v566
    %v568 = vadd.f32 %v564, %v567
    %vm569 = vweird.f32 %v563
    %vm570 = vweird.f32 %v564
    %vm571 = vmor %vm569, %vm570
    %v572 = vsel %vm571, %v564, %v568
    %v573 = vand.u32 2147483647, %v563
    %vm574 = vcmp.eq.f32.partialorder %v573, 8.507059e+37
    %v575 = vand.u32 %v563, 2147483648
    %v576 = vor.u32 1.1754944e-38, %v575
    %v577 = vsel %vm574, %v576, %v572
    %v578 = vmul.f32 %v553, %v577
    %v579 = vmin.f32 %v578, 1.0
    %v580 = vmax.f32 %v579, -1.0
    %v581 = vmul.f32 %v214, %v214
    %v582 = vmin.f32 16.0, %v581
    %v583 = vmul.f32 %v582, 2.1237322e-06
    %v584 = vadd.f32 %v583, 0.00028619796
    %v585 = vmul.f32 %v582, %v584
    %v586 = vadd.f32 %v585, 0.0036580483
    %v587 = vmul.f32 %v582, %v586
    %v588 = vadd.f32 %v587, 0.05243302
    %v589 = vmul.f32 %v582, %v588
    %v590 = vadd.f32 %v589, 0.18741608
    %v591 = vmul.f32 %v582, %v590
    %v592 = vadd.f32 %v591, 1.1283791
    %v593 = vmul.f32 %v214, %v592
    %v594 = vmul.f32 %v582, 3.8918573e-05
    %v595 = vadd.f32 %v594, 0.001143296
    %v596 = vmul.f32 %v582, %v595
    %v597 = vadd.f32 %v596, 0.014752088
    %v598 = vmul.f32 %v582, %v597
    %v599 = vadd.f32 %v598, 0.112945676
    %v600 = vmul.f32 %v582, %v599
    %v601 = vadd.f32 %v600, 0.4994258
    %v602 = vmul.f32 %v582, %v601
    %v603 = vadd.f32 %v602, 1.0
    %v604 = vrcp.pop %v603
    %v605 = vmul.f32 %v603, %v604
    %v606 = vsub.f32 1.0, %v605
    %v607 = vmul.f32 %v604, %v606
    %v608 = vadd.f32 %v604, %v607
    %vm609 = vweird.f32 %v603
    %vm610 = vweird.f32 %v604
    %vm611 = vmor %vm609, %vm610
    %v612 = vsel %vm611, %v604, %v608
    %v613 = vand.u32 2147483647, %v603
    %vm614 = vcmp.eq.f32.partialorder %v613, 8.507059e+37
    %v615 = vand.u32 %v603, 2147483648
    %v616 = vor.u32 1.1754944e-38, %v615
    %v617 = vsel %vm614, %v616, %v612
    %v618 = vmul.f32 %v593, %v617
    %v619 = vmin.f32 %v618, 1.0
    %v620 = vmax.f32 %v619, -1.0
    %v621 = vmul.f32 %v215, %v215
    %v622 = vmin.f32 16.0, %v621
    %v623 = vmul.f32 %v622, 2.1237322e-06
    %v624 = vadd.f32 %v623, 0.00028619796
    %v625 = vmul.f32 %v622, %v624
    %v626 = vadd.f32 %v625, 0.0036580483
    %v627 = vmul.f32 %v622, %v626
    %v628 = vadd.f32 %v627, 0.05243302
    %v629 = vmul.f32 %v622, %v628
    %v630 = vadd.f32 %v629, 0.18741608
    %v631 = vmul.f32 %v622, %v630
    %v632 = vadd.f32 %v631, 1.1283791
    %v633 = vmul.f32 %v215, %v632
    %v634 = vmul.f32 %v622, 3.8918573e-05
    %v635 = vadd.f32 %v634, 0.001143296
    %v636 = vmul.f32 %v622, %v635
    %v637 = vadd.f32 %v636, 0.014752088
    %v638 = vmul.f32 %v622, %v637
    %v639 = vadd.f32 %v638, 0.112945676
    %v640 = vmul.f32 %v622, %v639
    %v641 = vadd.f32 %v640, 0.4994258
    %v642 = vmul.f32 %v622, %v641
    %v643 = vadd.f32 %v642, 1.0
    %v644 = vrcp.pop %v643
    %v645 = vmul.f32 %v643, %v644
    %v646 = vsub.f32 1.0, %v645
    %v647 = vmul.f32 %v644, %v646
    %v648 = vadd.f32 %v644, %v647
    %vm649 = vweird.f32 %v643
    %vm650 = vweird.f32 %v644
    %vm651 = vmor %vm649, %vm650
    %v652 = vsel %vm651, %v644, %v648
    %v653 = vand.u32 2147483647, %v643
    %vm654 = vcmp.eq.f32.partialorder %v653, 8.507059e+37
    %v655 = vand.u32 %v643, 2147483648
    %v656 = vor.u32 1.1754944e-38, %v655
    %v657 = vsel %vm654, %v656, %v652
    %v658 = vmul.f32 %v633, %v657
    %v659 = vmin.f32 %v658, 1.0
    %v660 = vmax.f32 %v659, -1.0
    %v661 = vmul.f32 %v216, %v216
    %v662 = vmin.f32 16.0, %v661
    %v663 = vmul.f32 %v662, 2.1237322e-06
    %v664 = vadd.f32 %v663, 0.00028619796
    %v665 = vmul.f32 %v662, %v664
    %v666 = vadd.f32 %v665, 0.0036580483
    %v667 = vmul.f32 %v662, %v666
    %v668 = vadd.f32 %v667, 0.05243302
    %v669 = vmul.f32 %v662, %v668
    %v670 = vadd.f32 %v669, 0.18741608
    %v671 = vmul.f32 %v662, %v670
    %v672 = vadd.f32 %v671, 1.1283791
    %v673 = vmul.f32 %v216, %v672
    %v674 = vmul.f32 %v662, 3.8918573e-05
    %v675 = vadd.f32 %v674, 0.001143296
    %v676 = vmul.f32 %v662, %v675
    %v677 = vadd.f32 %v676, 0.014752088
    %v678 = vmul.f32 %v662, %v677
    %v679 = vadd.f32 %v678, 0.112945676
    %v680 = vmul.f32 %v662, %v679
    %v681 = vadd.f32 %v680, 0.4994258
    %v682 = vmul.f32 %v662, %v681
    %v683 = vadd.f32 %v682, 1.0
    %v684 = vrcp.pop %v683
    %v685 = vmul.f32 %v683, %v684
    %v686 = vsub.f32 1.0, %v685
    %v687 = vmul.f32 %v684, %v686
    %v688 = vadd.f32 %v684, %v687
    %vm689 = vweird.f32 %v683
    %vm690 = vweird.f32 %v684
    %vm691 = vmor %vm689, %vm690
    %v692 = vsel %vm691, %v684, %v688
    %v693 = vand.u32 2147483647, %v683
    %vm694 = vcmp.eq.f32.partialorder %v693, 8.507059e+37
    %v695 = vand.u32 %v683, 2147483648
    %v696 = vor.u32 1.1754944e-38, %v695
    %v697 = vsel %vm694, %v696, %v692
    %v698 = vmul.f32 %v673, %v697
    %v699 = vmin.f32 %v698, 1.0
    %v700 = vmax.f32 %v699, -1.0
    %v701 = vmul.f32 %v217, %v217
    %v702 = vmin.f32 16.0, %v701
    %v703 = vmul.f32 %v702, 2.1237322e-06
    %v704 = vadd.f32 %v703, 0.00028619796
    %v705 = vmul.f32 %v702, %v704
    %v706 = vadd.f32 %v705, 0.0036580483
    %v707 = vmul.f32 %v702, %v706
    %v708 = vadd.f32 %v707, 0.05243302
    %v709 = vmul.f32 %v702, %v708
    %v710 = vadd.f32 %v709, 0.18741608
    %v711 = vmul.f32 %v702, %v710
    %v712 = vadd.f32 %v711, 1.1283791
    %v713 = vmul.f32 %v217, %v712
    %v714 = vmul.f32 %v702, 3.8918573e-05
    %v715 = vadd.f32 %v714, 0.001143296
    %v716 = vmul.f32 %v702, %v715
    %v717 = vadd.f32 %v716, 0.014752088
    %v718 = vmul.f32 %v702, %v717
    %v719 = vadd.f32 %v718, 0.112945676
    %v720 = vmul.f32 %v702, %v719
    %v721 = vadd.f32 %v720, 0.4994258
    %v722 = vmul.f32 %v702, %v721
    %v723 = vadd.f32 %v722, 1.0
    %v724 = vrcp.pop %v723
    %v725 = vmul.f32 %v723, %v724
    %v726 = vsub.f32 1.0, %v725
    %v727 = vmul.f32 %v724, %v726
    %v728 = vadd.f32 %v724, %v727
    %vm729 = vweird.f32 %v723
    %vm730 = vweird.f32 %v724
    %vm731 = vmor %vm729, %vm730
    %v732 = vsel %vm731, %v724, %v728
    %v733 = vand.u32 2147483647, %v723
    %vm734 = vcmp.eq.f32.partialorder %v733, 8.507059e+37
    %v735 = vand.u32 %v723, 2147483648
    %v736 = vor.u32 1.1754944e-38, %v735
    %v737 = vsel %vm734, %v736, %v732
    %v738 = vmul.f32 %v713, %v737
    %v739 = vmin.f32 %v738, 1.0
    %v740 = vmax.f32 %v739, -1.0
    %v741 = vmul.f32 %v218, %v218
    %v742 = vmin.f32 16.0, %v741
    %v743 = vmul.f32 %v742, 2.1237322e-06
    %v744 = vadd.f32 %v743, 0.00028619796
    %v745 = vmul.f32 %v742, %v744
    %v746 = vadd.f32 %v745, 0.0036580483
    %v747 = vmul.f32 %v742, %v746
    %v748 = vadd.f32 %v747, 0.05243302
    %v749 = vmul.f32 %v742, %v748
    %v750 = vadd.f32 %v749, 0.18741608
    %v751 = vmul.f32 %v742, %v750
    %v752 = vadd.f32 %v751, 1.1283791
    %v753 = vmul.f32 %v218, %v752
    %v754 = vmul.f32 %v742, 3.8918573e-05
    %v755 = vadd.f32 %v754, 0.001143296
    %v756 = vmul.f32 %v742, %v755
    %v757 = vadd.f32 %v756, 0.014752088
    %v758 = vmul.f32 %v742, %v757
    %v759 = vadd.f32 %v758, 0.112945676
    %v760 = vmul.f32 %v742, %v759
    %v761 = vadd.f32 %v760, 0.4994258
    %v762 = vmul.f32 %v742, %v761
    %v763 = vadd.f32 %v762, 1.0
    %v764 = vrcp.pop %v763
    %v765 = vmul.f32 %v763, %v764
    %v766 = vsub.f32 1.0, %v765
    %v767 = vmul.f32 %v764, %v766
    %v768 = vadd.f32 %v764, %v767
    %vm769 = vweird.f32 %v763
    %vm770 = vweird.f32 %v764
    %vm771 = vmor %vm769, %vm770
    %v772 = vsel %vm771, %v764, %v768
    %v773 = vand.u32 2147483647, %v763
    %vm774 = vcmp.eq.f32.partialorder %v773, 8.507059e+37
    %v775 = vand.u32 %v763, 2147483648
    %v776 = vor.u32 1.1754944e-38, %v775
    %v777 = vsel %vm774, %v776, %v772
    %v778 = vmul.f32 %v753, %v777
    %v779 = vmin.f32 %v778, 1.0
    %v780 = vmax.f32 %v779, -1.0
    %v781 = vmul.f32 %v219, %v219
    %v782 = vmin.f32 16.0, %v781
    %v783 = vmul.f32 %v782, 2.1237322e-06
    %v784 = vadd.f32 %v783, 0.00028619796
    %v785 = vmul.f32 %v782, %v784
    %v786 = vadd.f32 %v785, 0.0036580483
    %v787 = vmul.f32 %v782, %v786
    %v788 = vadd.f32 %v787, 0.05243302
    %v789 = vmul.f32 %v782, %v788
    %v790 = vadd.f32 %v789, 0.18741608
    %v791 = vmul.f32 %v782, %v790
    %v792 = vadd.f32 %v791, 1.1283791
    %v793 = vmul.f32 %v219, %v792
    %v794 = vmul.f32 %v782, 3.8918573e-05
    %v795 = vadd.f32 %v794, 0.001143296
    %v796 = vmul.f32 %v782, %v795
    %v797 = vadd.f32 %v796, 0.014752088
    %v798 = vmul.f32 %v782, %v797
    %v799 = vadd.f32 %v798, 0.112945676
    %v800 = vmul.f32 %v782, %v799
    %v801 = vadd.f32 %v800, 0.4994258
    %v802 = vmul.f32 %v782, %v801
    %v803 = vadd.f32 %v802, 1.0
    %v804 = vrcp.pop %v803
    %v805 = vmul.f32 %v803, %v804
    %v806 = vsub.f32 1.0, %v805
    %v807 = vmul.f32 %v804, %v806
    %v808 = vadd.f32 %v804, %v807
    %vm809 = vweird.f32 %v803
    %vm810 = vweird.f32 %v804
    %vm811 = vmor %vm809, %vm810
    %v812 = vsel %vm811, %v804, %v808
    %v813 = vand.u32 2147483647, %v803
    %vm814 = vcmp.eq.f32.partialorder %v813, 8.507059e+37
    %v815 = vand.u32 %v803, 2147483648
    %v816 = vor.u32 1.1754944e-38, %v815
    %v817 = vsel %vm814, %v816, %v812
    %v818 = vmul.f32 %v793, %v817
    %v819 = vmin.f32 %v818, 1.0
    %v820 = vmax.f32 %v819, -1.0
    %v821 = vmul.f32 %v220, %v220
    %v822 = vmin.f32 16.0, %v821
    %v823 = vmul.f32 %v822, 2.1237322e-06
    %v824 = vadd.f32 %v823, 0.00028619796
    %v825 = vmul.f32 %v822, %v824
    %v826 = vadd.f32 %v825, 0.0036580483
    %v827 = vmul.f32 %v822, %v826
    %v828 = vadd.f32 %v827, 0.05243302
    %v829 = vmul.f32 %v822, %v828
    %v830 = vadd.f32 %v829, 0.18741608
    %v831 = vmul.f32 %v822, %v830
    %v832 = vadd.f32 %v831, 1.1283791
    %v833 = vmul.f32 %v220, %v832
    %v834 = vmul.f32 %v822, 3.8918573e-05
    %v835 = vadd.f32 %v834, 0.001143296
    %v836 = vmul.f32 %v822, %v835
    %v837 = vadd.f32 %v836, 0.014752088
    %v838 = vmul.f32 %v822, %v837
    %v839 = vadd.f32 %v838, 0.112945676
    %v840 = vmul.f32 %v822, %v839
    %v841 = vadd.f32 %v840, 0.4994258
    %v842 = vmul.f32 %v822, %v841
    %v843 = vadd.f32 %v842, 1.0
    %v844 = vrcp.pop %v843
    %v845 = vmul.f32 %v843, %v844
    %v846 = vsub.f32 1.0, %v845
    %v847 = vmul.f32 %v844, %v846
    %v848 = vadd.f32 %v844, %v847
    %vm849 = vweird.f32 %v843
    %vm850 = vweird.f32 %v844
    %vm851 = vmor %vm849, %vm850
    %v852 = vsel %vm851, %v844, %v848
    %v853 = vand.u32 2147483647, %v843
    %vm854 = vcmp.eq.f32.partialorder %v853, 8.507059e+37
    %v855 = vand.u32 %v843, 2147483648
    %v856 = vor.u32 1.1754944e-38, %v855
    %v857 = vsel %vm854, %v856, %v852
    %v858 = vmul.f32 %v833, %v857
    %v859 = vmin.f32 %v858, 1.0
    %v860 = vmax.f32 %v859, -1.0
    %v861 = vadd.f32 %v260, 1.0
    %v862 = vadd.f32 %v300, 1.0
    %v863 = vadd.f32 %v340, 1.0
    %v864 = vadd.f32 %v380, 1.0
    %v865 = vadd.f32 %v420, 1.0
    %v866 = vadd.f32 %v460, 1.0
    %v867 = vadd.f32 %v500, 1.0
    %v868 = vadd.f32 %v540, 1.0
    %v869 = vadd.f32 %v580, 1.0
    %v870 = vadd.f32 %v620, 1.0
    %v871 = vadd.f32 %v660, 1.0
    %v872 = vadd.f32 %v700, 1.0
    %v873 = vadd.f32 %v740, 1.0
    %v874 = vadd.f32 %v780, 1.0
    %v875 = vadd.f32 %v820, 1.0
    %v876 = vadd.f32 %v860, 1.0
    %v877 = vmul.f32 %v189, %v861
    %v878 = vmul.f32 %v190, %v862
    %v879 = vmul.f32 %v191, %v863
    %v880 = vmul.f32 %v192, %v864
    %v881 = vmul.f32 %v193, %v865
    %v882 = vmul.f32 %v194, %v866
    %v883 = vmul.f32 %v195, %v867
    %v884 = vmul.f32 %v196, %v868
    %v885 = vmul.f32 %v197, %v869
    %v886 = vmul.f32 %v198, %v870
    %v887 = vmul.f32 %v199, %v871
    %v888 = vmul.f32 %v200, %v872
    %v889 = vmul.f32 %v201, %v873
    %v890 = vmul.f32 %v202, %v874
    %v891 = vmul.f32 %v203, %v875
    %v892 = vmul.f32 %v204, %v876
    %v893 = vld [vmem:[#allocation2] sm:$0xff]
    %v894 = vld [vmem:[#allocation2 + $0x8] sm:$0xff]
    %v895 = vld [vmem:[#allocation2 + $0x10] sm:$0xff]
    %v896 = vld [vmem:[#allocation2 + $0x18] sm:$0xff]
    %v897 = vld [vmem:[#allocation2 + $0x20] sm:$0xff]
    %v898 = vld [vmem:[#allocation2 + $0x28] sm:$0xff]
    %v899 = vld [vmem:[#allocation2 + $0x30] sm:$0xff]
    %v900 = vld [vmem:[#allocation2 + $0x38] sm:$0xff]
    %v901 = vld [vmem:[#allocation2 + $0x40] sm:$0xff]
    %v902 = vld [vmem:[#allocation2 + $0x48] sm:$0xff]
    %v903 = vld [vmem:[#allocation2 + $0x50] sm:$0xff]
    %v904 = vld [vmem:[#allocation2 + $0x58] sm:$0xff]
    %v905 = vld [vmem:[#allocation2 + $0x60] sm:$0xff]
    %v906 = vld [vmem:[#allocation2 + $0x68] sm:$0xff]
    %v907 = vld [vmem:[#allocation2 + $0x70] sm:$0xff]
    %v908 = vld [vmem:[#allocation2 + $0x78] sm:$0xff]
    %v909 = vld [vmem:[#allocation8] sm:$0xff]
    %v910 = vld [vmem:[#allocation8 + $0x8] sm:$0xff]
    %v911 = vld [vmem:[#allocation8 + $0x10] sm:$0xff]
    %v912 = vld [vmem:[#allocation8 + $0x18] sm:$0xff]
    %v913 = vld [vmem:[#allocation8 + $0x20] sm:$0xff]
    %v914 = vld [vmem:[#allocation8 + $0x28] sm:$0xff]
    %v915 = vld [vmem:[#allocation8 + $0x30] sm:$0xff]
    %v916 = vld [vmem:[#allocation8 + $0x38] sm:$0xff]
    %v917 = vld [vmem:[#allocation8 + $0x40] sm:$0xff]
    %v918 = vld [vmem:[#allocation8 + $0x48] sm:$0xff]
    %v919 = vld [vmem:[#allocation8 + $0x50] sm:$0xff]
    %v920 = vld [vmem:[#allocation8 + $0x58] sm:$0xff]
    %v921 = vld [vmem:[#allocation8 + $0x60] sm:$0xff]
    %v922 = vld [vmem:[#allocation8 + $0x68] sm:$0xff]
    %v923 = vld [vmem:[#allocation8 + $0x70] sm:$0xff]
    %v924 = vld [vmem:[#allocation8 + $0x78] sm:$0xff]
    %925 = vmatpush.msra.mxu0 %v924
    %926 = vmatpush.msra.mxu0 %v923
    %927 = vmatpush.msra.mxu0 %v922
    %928 = vmatpush.msra.mxu0 %v921
    %929 = vmatpush.msra.mxu0 %v920
    %930 = vmatpush.msra.mxu0 %v919
    %931 = vmatpush.msra.mxu0 %v918
    %932 = vmatpush.msra.mxu0 %v917
    %933 = vmatpush.msra.mxu0 %v916
    %934 = vmatpush.msra.mxu0 %v915
    %935 = vmatpush.msra.mxu0 %v914
    %936 = vmatpush.msra.mxu0 %v913
    %937 = vmatpush.msra.mxu0 %v912
    %938 = vmatpush.msra.mxu0 %v911
    %939 = vmatpush.msra.mxu0 %v910
    %940 = vmatpush.msra.mxu0 %v909
    %941 = vmatmul.f32.gmra.mxu0 %v877
    %v942 = vpop.f32.mrf.mxu0
    %v943 = vadd.f32 0.0, %v942
    %944 = vmatmul.f32.gmra.mxu0 %v878
    %v945 = vpop.f32.mrf.mxu0
    %v946 = vadd.f32 0.0, %v945
    %947 = vmatmul.f32.gmra.mxu0 %v879
    %v948 = vpop.f32.mrf.mxu0
    %v949 = vadd.f32 0.0, %v948
    %950 = vmatmul.f32.gmra.mxu0 %v880
    %v951 = vpop.f32.mrf.mxu0
    %v952 = vadd.f32 0.0, %v951
    %953 = vmatmul.f32.gmra.mxu0 %v881
    %v954 = vpop.f32.mrf.mxu0
    %v955 = vadd.f32 0.0, %v954
    %956 = vmatmul.f32.gmra.mxu0 %v882
    %v957 = vpop.f32.mrf.mxu0
    %v958 = vadd.f32 0.0, %v957
    %959 = vmatmul.f32.gmra.mxu0 %v883
    %v960 = vpop.f32.mrf.mxu0
    %v961 = vadd.f32 0.0, %v960
    %962 = vmatmul.f32.gmra.mxu0 %v884
    %v963 = vpop.f32.mrf.mxu0
    %v964 = vadd.f32 0.0, %v963
    %965 = vmatmul.f32.gmra.mxu0 %v885
    %v966 = vpop.f32.mrf.mxu0
    %v967 = vadd.f32 0.0, %v966
    %968 = vmatmul.f32.gmra.mxu0 %v886
    %v969 = vpop.f32.mrf.mxu0
    %v970 = vadd.f32 0.0, %v969
    %971 = vmatmul.f32.gmra.mxu0 %v887
    %v972 = vpop.f32.mrf.mxu0
    %v973 = vadd.f32 0.0, %v972
    %974 = vmatmul.f32.gmra.mxu0 %v888
    %v975 = vpop.f32.mrf.mxu0
    %v976 = vadd.f32 0.0, %v975
    %977 = vmatmul.f32.gmra.mxu0 %v889
    %v978 = vpop.f32.mrf.mxu0
    %v979 = vadd.f32 0.0, %v978
    %980 = vmatmul.f32.gmra.mxu0 %v890
    %v981 = vpop.f32.mrf.mxu0
    %v982 = vadd.f32 0.0, %v981
    %983 = vmatmul.f32.gmra.mxu0 %v891
    %v984 = vpop.f32.mrf.mxu0
    %v985 = vadd.f32 0.0, %v984
    %986 = vmatmul.f32.gmra.mxu0 %v892
    %v987 = vpop.f32.mrf.mxu0
    %v988 = vadd.f32 0.0, %v987
    %989 = vdwg.mxu0
    %v990 = vadd.f32 %v893, %v943
    %v991 = vadd.f32 %v894, %v946
    %v992 = vadd.f32 %v895, %v949
    %v993 = vadd.f32 %v896, %v952
    %v994 = vadd.f32 %v897, %v955
    %v995 = vadd.f32 %v898, %v958
    %v996 = vadd.f32 %v899, %v961
    %v997 = vadd.f32 %v900, %v964
    %v998 = vadd.f32 %v901, %v967
    %v999 = vadd.f32 %v902, %v970
    %v1000 = vadd.f32 %v903, %v973
    %v1001 = vadd.f32 %v904, %v976
    %v1002 = vadd.f32 %v905, %v979
    %v1003 = vadd.f32 %v906, %v982
    %v1004 = vadd.f32 %v907, %v985
    %v1005 = vadd.f32 %v908, %v988
    %1006 = vst [vmem:[#allocation2] sm:$0xff] %v990
    %1007 = vst [vmem:[#allocation2 + $0x8] sm:$0xff] %v991
    %1008 = vst [vmem:[#allocation2 + $0x10] sm:$0xff] %v992
    %1009 = vst [vmem:[#allocation2 + $0x18] sm:$0xff] %v993
    %1010 = vst [vmem:[#allocation2 + $0x20] sm:$0xff] %v994
    %1011 = vst [vmem:[#allocation2 + $0x28] sm:$0xff] %v995
    %1012 = vst [vmem:[#allocation2 + $0x30] sm:$0xff] %v996
    %1013 = vst [vmem:[#allocation2 + $0x38] sm:$0xff] %v997
    %1014 = vst [vmem:[#allocation2 + $0x40] sm:$0xff] %v998
    %1015 = vst [vmem:[#allocation2 + $0x48] sm:$0xff] %v999
    %1016 = vst [vmem:[#allocation2 + $0x50] sm:$0xff] %v1000
    %1017 = vst [vmem:[#allocation2 + $0x58] sm:$0xff] %v1001
    %1018 = vst [vmem:[#allocation2 + $0x60] sm:$0xff] %v1002
    %1019 = vst [vmem:[#allocation2 + $0x68] sm:$0xff] %v1003
    %1020 = vst [vmem:[#allocation2 + $0x70] sm:$0xff] %v1004
    %1021 = vst [vmem:[#allocation2 + $0x78] sm:$0xff] %v1005
    // Predicated region
    $region38: #{tpu_custom_call.1} parent=1 // pred_check
      %p1022 = pneg %p68
    $region39: #{tpu_custom_call.1} parent=1 // pred_check_branch
      %1024 = sbr.rel (%p1022) target = $region41
    $region40: #{tpu_custom_call.1} parent=1 // pred_region
      %v1025 = vld [vmem:[#allocation2] sm:$0xff]
      %v1026 = vld [vmem:[#allocation2 + $0x8] sm:$0xff]
      %v1027 = vld [vmem:[#allocation2 + $0x10] sm:$0xff]
      %v1028 = vld [vmem:[#allocation2 + $0x18] sm:$0xff]
      %v1029 = vld [vmem:[#allocation2 + $0x20] sm:$0xff]
      %v1030 = vld [vmem:[#allocation2 + $0x28] sm:$0xff]
      %v1031 = vld [vmem:[#allocation2 + $0x30] sm:$0xff]
      %v1032 = vld [vmem:[#allocation2 + $0x38] sm:$0xff]
      %v1033 = vld [vmem:[#allocation2 + $0x40] sm:$0xff]
      %v1034 = vld [vmem:[#allocation2 + $0x48] sm:$0xff]
      %v1035 = vld [vmem:[#allocation2 + $0x50] sm:$0xff]
      %v1036 = vld [vmem:[#allocation2 + $0x58] sm:$0xff]
      %v1037 = vld [vmem:[#allocation2 + $0x60] sm:$0xff]
      %v1038 = vld [vmem:[#allocation2 + $0x68] sm:$0xff]
      %v1039 = vld [vmem:[#allocation2 + $0x70] sm:$0xff]
      %v1040 = vld [vmem:[#allocation2 + $0x78] sm:$0xff]
      %v1041 = vld [vmem:[%s4] sm:$0x1]
      %v1043 = vperm.slane %v1041, 0
      %v1045 = vadd.f32 %v1025, %v1043
      %v1046 = vadd.f32 %v1026, %v1043
      %v1047 = vadd.f32 %v1027, %v1043
      %v1048 = vadd.f32 %v1028, %v1043
      %v1049 = vadd.f32 %v1029, %v1043
      %v1050 = vadd.f32 %v1030, %v1043
      %v1051 = vadd.f32 %v1031, %v1043
      %v1052 = vadd.f32 %v1032, %v1043
      %v1053 = vadd.f32 %v1033, %v1043
      %v1054 = vadd.f32 %v1034, %v1043
      %v1055 = vadd.f32 %v1035, %v1043
      %v1056 = vadd.f32 %v1036, %v1043
      %v1057 = vadd.f32 %v1037, %v1043
      %v1058 = vadd.f32 %v1038, %v1043
      %v1059 = vadd.f32 %v1039, %v1043
      %v1060 = vadd.f32 %v1040, %v1043
      %1061 = vst [vmem:[#allocation9] sm:$0xff] %v1045
      %1062 = vst [vmem:[#allocation9 + $0x8] sm:$0xff] %v1046
      %1063 = vst [vmem:[#allocation9 + $0x10] sm:$0xff] %v1047
      %1064 = vst [vmem:[#allocation9 + $0x18] sm:$0xff] %v1048
      %1065 = vst [vmem:[#allocation9 + $0x20] sm:$0xff] %v1049
      %1066 = vst [vmem:[#allocation9 + $0x28] sm:$0xff] %v1050
      %1067 = vst [vmem:[#allocation9 + $0x30] sm:$0xff] %v1051
      %1068 = vst [vmem:[#allocation9 + $0x38] sm:$0xff] %v1052
      %1069 = vst [vmem:[#allocation9 + $0x40] sm:$0xff] %v1053
      %1070 = vst [vmem:[#allocation9 + $0x48] sm:$0xff] %v1054
      %1071 = vst [vmem:[#allocation9 + $0x50] sm:$0xff] %v1055
      %1072 = vst [vmem:[#allocation9 + $0x58] sm:$0xff] %v1056
      %1073 = vst [vmem:[#allocation9 + $0x60] sm:$0xff] %v1057
      %1074 = vst [vmem:[#allocation9 + $0x68] sm:$0xff] %v1058
      %1075 = vst [vmem:[#allocation9 + $0x70] sm:$0xff] %v1059
      %1076 = vst [vmem:[#allocation9 + $0x78] sm:$0xff] %v1060
    $region41: #{tpu_custom_call.1} parent=1 // pred_fallthru
      _
    // Predicated region
    $region42: #{tpu_custom_call.1} parent=1 // pred_check
      _
    $region43: #{tpu_custom_call.1} parent=1 // pred_check_branch
      %1078 = sbr.rel (0) target = $region45
    $region44: #{tpu_custom_call.1} parent=1 // pred_region
      %1080 = vsyncadd [#allocation5], 0
      %s1081 = sshll.u32 [#allocation9], 4
      %s1082 = int_to_ptr.vmem [resolvable:$true] %s1081
      %s1083 = sshll.u32 %s5, 4
      %s1084 = int_to_ptr.hbm [resolvable:$true] %s1083
      %1089 = dma.vmem_to_hbm [thread:$0]  %s1082, 2048, %s1084, [#allocation5], 128, 128, 8
    $region45: #{tpu_custom_call.1} parent=1 // pred_fallthru
      _
    // Predicated region
    $region46: #{tpu_custom_call.1} parent=1 // pred_check
      _
    $region47: #{tpu_custom_call.1} parent=1 // pred_check_branch
      %1091 = sbr.rel (0) target = $region49
    $region48: #{tpu_custom_call.1} parent=1 // pred_region
      %1093 = dma.done [#allocation5], 2048
    $region49: #{tpu_custom_call.1} parent=1 // pred_fallthru
      _
    %1094 = vsyncpa [#allocation4], 1
    %1095 = vsyncpa [#allocation7], 1
    %1096 = vsyncpa [#allocation5], 1

</llo_original>
